<compile_context>
chip_gen: v5e
topology: v5e:2x2
jax: 0.10.0
libtpu: 0.0.40
codegen_flags: <defaults>
</compile_context>

<pallas_src>
import math
import functools

import jax
import jax.numpy as jnp
from jax.experimental import pallas as pl
from jax.experimental.pallas import tpu as pltpu

_INV_SQRT2 = 0.7071067811865476
_MiB = 1024 * 1024
_VMEM_BUDGET = 40 * _MiB      # buffer budget (conservative for v7x's 64 MiB/TC)
_VMEM_LIMIT_CAP = 48 * _MiB   # never request more than this from the compiler


def _bert_intermediate_kernel(x_ref, w_ref, b_ref, o_ref):
    # x_ref: (tm, H), w_ref: (H, tn), b_ref: (1, tn), o_ref: (tm, tn)
    # Native-dtype operands go straight to the MXU; accumulate in f32.
    acc = jnp.dot(x_ref[...], w_ref[...], preferred_element_type=jnp.float32)
    y = acc + b_ref[...].astype(jnp.float32)
    # Exact erf-GELU (torch parity): x * 0.5 * (1 + erf(x / sqrt(2))).
    # TODO(synk): a bf16 / tanh-approx epilogue would relieve the VALU slot on
    # v6e/v7x once W is resident, but it changes numerics vs torch's exact erf,
    # so it stays f32 (also matches v5e guidance: no bf16 VPU there).
    y = y * 0.5 * (1.0 + jax.lax.erf(y * _INV_SQRT2))
    o_ref[...] = y.astype(o_ref.dtype)


def _round_up(x, m):
    return ((x + m - 1) // m) * m


def _sublane_multiple(dtype):
    # 8 rows for 4-byte dtypes, 16 for 2-byte (bf16), 32 for 1-byte dtypes.
    return max(8, 32 // jnp.dtype(dtype).itemsize)


def _buffers_bytes(tm, tn, H, x_dt, w_dt, b_dt, o_dt):
    # Pallas double-buffers every BlockSpec operand by default; even a
    # constant-index weight keeps its second buffer allocated, so count 2x.
    return 2 * (tm * H * jnp.dtype(x_dt).itemsize
                + H * tn * jnp.dtype(w_dt).itemsize
                + tn * jnp.dtype(b_dt).itemsize
                + tm * tn * jnp.dtype(o_dt).itemsize)


def _choose_tm(candidate, M, sub):
    if candidate >= M:
        return M                               # full-dim block: always legal
    return max(sub, (candidate // sub) * sub)  # multiple of sub; partial last block is masked


@functools.partial(jax.jit, static_argnames=("tm", "tn"))
def bert_intermediate(hidden_states, weight, bias, *, tm=512, tn=512):
    """hidden_states: [..., H]; weight: [H, I] (pre-transposed); bias: [I]."""
    orig_shape = hidden_states.shape
    H = orig_shape[-1]
    I = weight.shape[1]

    x = hidden_states.reshape(-1, H)
    M = x.shape[0]
    b2d = bias.reshape(1, I)

    x_dt, w_dt, b_dt = x.dtype, weight.dtype, bias.dtype
    out_dtype = hidden_states.dtype
    sub = _sublane_multiple(x_dt)

    # ---- tiling choice -----------------------------------------------------
    # Preferred: whole weight VMEM-resident (constant index_map -> one DMA),
    # grid only over row tiles.
    tm_eff, tn_eff, w_resident = None, I, False
    cands = []
    for c in (tm, 512, 256, 128, 64, 32, 16, 8):
        c = _choose_tm(c, M, sub)
        if c not in cands:
            cands.append(c)
    for c in sorted(cands, reverse=True):
        if _buffers_bytes(c, I, H, x_dt, w_dt, b_dt, out_dtype) <= _VMEM_BUDGET:
            tm_eff, w_resident = c, True
            break

    if not w_resident:
        # Fallback: stream the weight in (H, tn) slabs; weight-varying grid
        # axis is OUTERMOST so each slab is DMA'd once (not once per row tile).
        tm_eff = _choose_tm(min(tm, 256), M, sub)
        tn_eff = max(128, (min(tn, I) // 128) * 128)
        while (tn_eff > 128 and
               _buffers_bytes(tm_eff, tn_eff, H, x_dt, w_dt, b_dt, out_dtype) > _VMEM_BUDGET):
            tn_eff = max(128, ((tn_eff // 2) // 128) * 128)
        while (tm_eff > sub and
               _buffers_bytes(tm_eff, tn_eff, H, x_dt, w_dt, b_dt, out_dtype) > _VMEM_BUDGET):
            tm_eff = max(sub, ((tm_eff // 2) // sub) * sub)

    gm = pl.cdiv(M, tm_eff)
    gn = pl.cdiv(I, tn_eff)

    if w_resident:
        grid = (gm,)
        in_specs = [
            pl.BlockSpec((tm_eff, H), lambda i: (i, 0)),   # x row tile
            pl.BlockSpec((H, I), lambda i: (0, 0)),        # W resident: DMA'd once
            pl.BlockSpec((1, I), lambda i: (0, 0)),        # bias resident
        ]
        out_specs = pl.BlockSpec((tm_eff, I), lambda i: (i, 0))
        dim_sem = ("parallel",)
        x_reads, w_reads = 1, 1
    else:
        grid = (gn, gm)                                    # j (weight axis) outermost
        in_specs = [
            pl.BlockSpec((tm_eff, H), lambda j, i: (i, 0)),
            pl.BlockSpec((H, tn_eff), lambda j, i: (0, j)),
            pl.BlockSpec((1, tn_eff), lambda j, i: (0, j)),
        ]
        out_specs = pl.BlockSpec((tm_eff, tn_eff), lambda j, i: (i, j))
        dim_sem = ("parallel", "parallel")
        x_reads, w_reads = gn, 1

    need = _buffers_bytes(tm_eff, tn_eff, H, x_dt, w_dt, b_dt, out_dtype)
    vmem_limit = int(min(max(need + 8 * _MiB, 16 * _MiB), _VMEM_LIMIT_CAP))

    cost = pl.CostEstimate(
        flops=2 * M * H * I,
        transcendentals=M * I,
        bytes_accessed=(x_reads * M * H * jnp.dtype(x_dt).itemsize
                        + w_reads * H * I * jnp.dtype(w_dt).itemsize
                        + I * jnp.dtype(b_dt).itemsize
                        + M * I * jnp.dtype(out_dtype).itemsize),
    )

    out = pl.pallas_call(
        _bert_intermediate_kernel,
        out_shape=jax.ShapeDtypeStruct((M, I), out_dtype),
        grid_spec=pltpu.PrefetchScalarGridSpec(
            num_scalar_prefetch=0,
            grid=grid,
            in_specs=in_specs,
            out_specs=out_specs,
        ),
        compiler_params=pltpu.CompilerParams(
            dimension_semantics=dim_sem,
            vmem_limit_bytes=vmem_limit,
        ),
        cost_estimate=cost,
    )(x, weight, b2d)

    return out.reshape(*orig_shape[:-1], I)


if __name__ == "__main__":
    # Small config consistent with BertIntermediate: hidden_size=32, intermediate_size=128.
    batch, seq, hidden_size, intermediate_size = 2, 8, 32, 128

    key = jax.random.PRNGKey(0)
    k_x, k_w, k_b = jax.random.split(key, 3)

    hidden_states = jax.random.normal(k_x, (batch, seq, hidden_size), dtype=jnp.float32)
    # Deterministic parameter init (synthetic, not a checkpoint load).
    weight = jax.random.normal(k_w, (hidden_size, intermediate_size), dtype=jnp.float32) * 0.02
    bias = jax.random.normal(k_b, (intermediate_size,), dtype=jnp.float32) * 0.02

    def ref_gelu(y):
        return y * 0.5 * (1.0 + jax.lax.erf(y / math.sqrt(2.0)))

    # f32 path (exact parity).
    out = bert_intermediate(hidden_states, weight, bias)
    jax.block_until_ready(out)
    y_ref = ref_gelu(hidden_states.reshape(-1, hidden_size) @ weight + bias)
    y_ref = y_ref.reshape(batch, seq, intermediate_size)
    assert jnp.allclose(out, y_ref, atol=1e-5, rtol=1e-5), "f32 mismatch vs reference"

    # bf16 path (native-dtype MXU operands, f32 accumulation + epilogue).
    hs_bf = hidden_states.astype(jnp.bfloat16)
    w_bf = weight.astype(jnp.bfloat16)
    b_bf = bias.astype(jnp.bfloat16)
    out_bf = bert_intermediate(hs_bf, w_bf, b_bf)
    jax.block_until_ready(out_bf)
    y_ref_bf = ref_gelu(hs_bf.astype(jnp.float32).reshape(-1, hidden_size)
                        @ w_bf.astype(jnp.float32) + b_bf.astype(jnp.float32))
    y_ref_bf = y_ref_bf.reshape(batch, seq, intermediate_size)
    assert jnp.allclose(out_bf.astype(jnp.float32), y_ref_bf, atol=5e-2, rtol=5e-2), \
        "bf16 mismatch vs reference"

    print("KERNEL_OK")
</pallas_src>

<mosaic_0001>
module attributes {stable_mosaic.version = 11 : i64} {
  func.func @_bert_intermediate_kernel(%arg0: i32, %arg1: memref<16x32xf32, #tpu.memory_space<vmem>>, %arg2: memref<32x128xf32, #tpu.memory_space<vmem>>, %arg3: memref<1x128xf32, #tpu.memory_space<vmem>>, %arg4: memref<16x128xf32, #tpu.memory_space<vmem>>) attributes {dimension_semantics = [#tpu.dimension_semantics<parallel>], iteration_bounds = array<i64: 1>, scalar_prefetch = 0 : i64, scratch_operands = 0 : i64, tpu.core_type = #tpu.core_type<tc>, window_params = [{transform_indices = @transform_0, window_bounds = array<i64: 16, 32>}, {pipeline_mode = #tpu.pipeline_mode<synchronous>, transform_indices = @transform_1, window_bounds = array<i64: 32, 128>}, {pipeline_mode = #tpu.pipeline_mode<synchronous>, transform_indices = @transform_2, window_bounds = array<i64: 1, 128>}, {transform_indices = @transform_3, window_bounds = array<i64: 16, 128>}]} {
    %c0 = arith.constant 0 : index
    %c0_0 = arith.constant 0 : index
    %0 = vector.load %arg1[%c0, %c0_0] : memref<16x32xf32, #tpu.memory_space<vmem>>, vector<16x32xf32>
    %c0_1 = arith.constant 0 : index
    %c0_2 = arith.constant 0 : index
    %1 = vector.load %arg2[%c0_1, %c0_2] : memref<32x128xf32, #tpu.memory_space<vmem>>, vector<32x128xf32>
    %cst = arith.constant dense<0.000000e+00> : vector<16x128xf32>
    %2 = tpu.matmul %0, %1, %cst {dimension_numbers = #tpu.dot_dimension_numbers<[1], [0], [0], [1], [0, 0, 1, 1], [], []>} : vector<16x32xf32>, vector<32x128xf32>, vector<16x128xf32> -> vector<16x128xf32>
    %c0_3 = arith.constant 0 : index
    %c0_4 = arith.constant 0 : index
    %3 = vector.load %arg3[%c0_3, %c0_4] : memref<1x128xf32, #tpu.memory_space<vmem>>, vector<1x128xf32>
    %4 = vector.broadcast %3 : vector<1x128xf32> to vector<16x128xf32>
    %5 = arith.addf %2, %4 : vector<16x128xf32>
    %cst_5 = arith.constant 5.000000e-01 : f32
    %6 = vector.broadcast %cst_5 : f32 to vector<16x128xf32>
    %7 = arith.mulf %5, %6 : vector<16x128xf32>
    %cst_6 = arith.constant 0.707106769 : f32
    %8 = vector.broadcast %cst_6 : f32 to vector<16x128xf32>
    %9 = arith.mulf %5, %8 : vector<16x128xf32>
    %10 = math.erf %9 : vector<16x128xf32>
    %cst_7 = arith.constant 1.000000e+00 : f32
    %11 = vector.broadcast %cst_7 : f32 to vector<16x128xf32>
    %12 = arith.addf %11, %10 : vector<16x128xf32>
    %13 = arith.mulf %7, %12 : vector<16x128xf32>
    %c0_8 = arith.constant 0 : index
    %c0_9 = arith.constant 0 : index
    %14 = vector.load %arg4[%c0_8, %c0_9] : memref<16x128xf32, #tpu.memory_space<vmem>>, vector<16x128xf32>
    tpu.vector_store %arg4[%c0_8, %c0_9], %13 {strides = array<i32>} : memref<16x128xf32, #tpu.memory_space<vmem>>, vector<16x128xf32>,
    return
  }
  func.func @transform_0(%arg0: i32) -> (i32, i32) {
    %c0_i32 = arith.constant 0 : i32
    %c0_i32_0 = arith.constant 0 : i32
    return %arg0, %c0_i32 : i32, i32
  }
  func.func @transform_1(%arg0: i32) -> (i32, i32) {
    %c0_i32 = arith.constant 0 : i32
    %c0_i32_0 = arith.constant 0 : i32
    %c0_i32_1 = arith.constant 0 : i32
    return %c0_i32, %c0_i32_0 : i32, i32
  }
  func.func @transform_2(%arg0: i32) -> (i32, i32) {
    %c0_i32 = arith.constant 0 : i32
    %c0_i32_0 = arith.constant 0 : i32
    %c0_i32_1 = arith.constant 0 : i32
    return %c0_i32, %c0_i32_0 : i32, i32
  }
  func.func @transform_3(%arg0: i32) -> (i32, i32) {
    %c0_i32 = arith.constant 0 : i32
    %c0_i32_0 = arith.constant 0 : i32
    return %arg0, %c0_i32 : i32, i32
  }
}

</mosaic_0001>

<llo_original>
// kernel: bert_intermediate.1
$region0: #{bert_intermediate.1}
  #allocation0 [shape = 'u32[]', space=smem, size = 0x4, offset = 0x4, fixed_abs, tag = 'smem constant byte address 0x4 - core index']
  #allocation1 [shape = 'u32[72,128]{1,0:T(1,128)}', space=vmem, size = 0x9000, scoped, tag = 'internal scratch']
  %s0 = inlined_call_operand.hbm [shape: f32[16,32], index: 0, kind: input, shape index: {}]
  %s1 = inlined_call_operand.hbm [shape: f32[32,128], index: 1, kind: input, shape index: {}]
  %s2 = inlined_call_operand.vmem [shape: f32[1,128], index: 2, kind: input, shape index: {}]
  %s3 = inlined_call_operand.hbm [shape: f32[16,128], index: 3, kind: output, shape index: {}]
  %s4 = sld [smem:[#allocation0]]
  $region30: #{bert_intermediate.1} parent=0
    _
  %s6 = ssub.s32 1, %s4
  %s7 = scalar_select 0, %s6, %s4
  $region1: #{bert_intermediate.1} parent=0
    #allocation2 [shape = 'u8[8192]{0}', space=vmem, size = 0x2000, scoped, tag = 'input window, operand 0, single buffered']
    #allocation3 [shape = 's32[1]{0}', space=sflag, size = 0x4, scoped, tag = 'scoped memory for bert_intermediate.1']
    #allocation4 [shape = 's32[1]{0}', space=sflag, size = 0x4, scoped, tag = 'scoped memory for bert_intermediate.1']
    #allocation5 [shape = 'u8[16384]{0}', space=vmem, size = 0x4000, scoped, tag = 'input window, operand 1, single buffered']
    #allocation6 [shape = 's32[1]{0}', space=sflag, size = 0x4, scoped, tag = 'scoped memory for bert_intermediate.1']
    #allocation7 [shape = 'u8[8192]{0}', space=vmem, size = 0x2000, scoped, tag = 'output window, operand 0, single buffered']
    %8 = vsyncpa [#allocation3], 0
    %9 = vsyncpa [#allocation6], 0
    %10 = vsyncpa [#allocation4], 0
    // Predicated region
    $region2: #{bert_intermediate.1} parent=1 // pred_check
      _
    $region3: #{bert_intermediate.1} parent=1 // pred_check_branch
      %12 = sbr.rel (0) target = $region5
    $region4: #{bert_intermediate.1} parent=1 // pred_region
      %14 = vsyncadd [#allocation3], 0
      %s15 = sshll.u32 %s0, 4
      %s16 = int_to_ptr.hbm [resolvable:$true] %s15
      %s17 = sshll.u32 [#allocation2], 4
      %s18 = int_to_ptr.vmem [resolvable:$true] %s17
      %23 = dma.hbm_to_vmem [thread:$0]  %s16, 256, %s18, [#allocation3], 128, 128, 8
    $region5: #{bert_intermediate.1} parent=1 // pred_fallthru
      _
    // Predicated region
    $region6: #{bert_intermediate.1} parent=1 // pred_check
      _
    $region7: #{bert_intermediate.1} parent=1 // pred_check_branch
      %25 = sbr.rel (0) target = $region9
    $region8: #{bert_intermediate.1} parent=1 // pred_region
      %27 = vsyncadd [#allocation6], 0
      %s28 = sshll.u32 %s1, 4
      %s29 = int_to_ptr.hbm [resolvable:$true] %s28
      %s30 = sshll.u32 [#allocation5], 4
      %s31 = int_to_ptr.vmem [resolvable:$true] %s30
      %36 = dma.hbm_to_vmem [thread:$0]  %s29, 512, %s31, [#allocation6], 128, 128, 8
    $region9: #{bert_intermediate.1} parent=1 // pred_fallthru
      _
    // Predicated region
    $region10: #{bert_intermediate.1} parent=1 // pred_check
      _
    $region11: #{bert_intermediate.1} parent=1 // pred_check_branch
      %38 = sbr.rel (0) target = $region13
    $region12: #{bert_intermediate.1} parent=1 // pred_region
      _
    $region13: #{bert_intermediate.1} parent=1 // pred_fallthru
      _
    // Predicated region
    $region14: #{bert_intermediate.1} parent=1 // pred_check
      _
    $region15: #{bert_intermediate.1} parent=1 // pred_check_branch
      %40 = sbr.rel (0) target = $region17
    $region16: #{bert_intermediate.1} parent=1 // pred_region
      %42 = dma.done [#allocation3], 256
    $region17: #{bert_intermediate.1} parent=1 // pred_fallthru
      _
    // Predicated region
    $region18: #{bert_intermediate.1} parent=1 // pred_check
      _
    $region19: #{bert_intermediate.1} parent=1 // pred_check_branch
      %44 = sbr.rel (0) target = $region21
    $region20: #{bert_intermediate.1} parent=1 // pred_region
      %46 = dma.done [#allocation6], 512
    $region21: #{bert_intermediate.1} parent=1 // pred_fallthru
      _
    %v47 = vld [vmem:[#allocation2] sm:$0xff]
    %v48 = vld [vmem:[#allocation2 + $0x8] sm:$0xff]
    %v49 = vld [vmem:[#allocation5] sm:$0xff]
    %v50 = vld [vmem:[#allocation5 + $0x8] sm:$0xff]
    %v51 = vld [vmem:[#allocation5 + $0x10] sm:$0xff]
    %v52 = vld [vmem:[#allocation5 + $0x18] sm:$0xff]
    %v53 = vld [vmem:[%s2] sm:$0x1]
    %v55 = vperm.slane %v53, 0
    %vm57 = vcmask 261120
    %v59 = vsel %vm57, %v47, 0
    %v62 = vsel %vm57, %v48, 0
    %64 = vmatpush.msra.mxu0 0.0
    %65 = vmatpush.msra.mxu0 0.0
    %66 = vmatpush.msra.mxu0 0.0
    %67 = vmatpush.msra.mxu0 0.0
    %68 = vmatpush.msra.mxu0 0.0
    %69 = vmatpush.msra.mxu0 0.0
    %70 = vmatpush.msra.mxu0 0.0
    %71 = vmatpush.msra.mxu0 0.0
    %72 = vmatpush.msra.mxu0 0.0
    %73 = vmatpush.msra.mxu0 0.0
    %74 = vmatpush.msra.mxu0 0.0
    %75 = vmatpush.msra.mxu0 0.0
    %76 = vmatpush.msra.mxu0 %v52
    %77 = vmatpush.msra.mxu0 %v51
    %78 = vmatpush.msra.mxu0 %v50
    %79 = vmatpush.msra.mxu0 %v49
    %80 = vmatmul.f32.gmra.mxu0 %v59
    %v81 = vpop.f32.mrf.mxu0
    %v82 = vadd.f32 %v55, %v81
    %83 = vmatmul.f32.gmra.mxu0 %v62
    %v84 = vpop.f32.mrf.mxu0
    %v85 = vadd.f32 %v55, %v84
    %86 = vdwg.mxu0
    %v87 = vmul.f32 %v82, 0.5
    %v88 = vmul.f32 %v85, 0.5
    %v89 = vmul.f32 %v82, 0.70710677
    %v90 = vmul.f32 %v85, 0.70710677
    %v91 = vmul.f32 %v89, %v89
    %v92 = vmin.f32 16.0, %v91
    %v93 = vmul.f32 %v92, 2.1237322e-06
    %v94 = vadd.f32 %v93, 0.00028619796
    %v95 = vmul.f32 %v92, %v94
    %v96 = vadd.f32 %v95, 0.0036580483
    %v97 = vmul.f32 %v92, %v96
    %v98 = vadd.f32 %v97, 0.05243302
    %v99 = vmul.f32 %v92, %v98
    %v100 = vadd.f32 %v99, 0.18741608
    %v101 = vmul.f32 %v92, %v100
    %v102 = vadd.f32 %v101, 1.1283791
    %v103 = vmul.f32 %v89, %v102
    %v104 = vmul.f32 %v92, 3.8918573e-05
    %v105 = vadd.f32 %v104, 0.001143296
    %v106 = vmul.f32 %v92, %v105
    %v107 = vadd.f32 %v106, 0.014752088
    %v108 = vmul.f32 %v92, %v107
    %v109 = vadd.f32 %v108, 0.112945676
    %v110 = vmul.f32 %v92, %v109
    %v111 = vadd.f32 %v110, 0.4994258
    %v112 = vmul.f32 %v92, %v111
    %v113 = vadd.f32 %v112, 1.0
    %v114 = vrcp.pop %v113
    %v115 = vmul.f32 %v113, %v114
    %v116 = vsub.f32 1.0, %v115
    %v117 = vmul.f32 %v114, %v116
    %v118 = vadd.f32 %v114, %v117
    %vm119 = vweird.f32 %v113
    %vm120 = vweird.f32 %v114
    %vm121 = vmor %vm119, %vm120
    %v122 = vsel %vm121, %v114, %v118
    %v123 = vand.u32 2147483647, %v113
    %vm124 = vcmp.eq.f32.partialorder %v123, 8.507059e+37
    %v125 = vand.u32 %v113, 2147483648
    %v126 = vor.u32 1.1754944e-38, %v125
    %v127 = vsel %vm124, %v126, %v122
    %v128 = vmul.f32 %v103, %v127
    %v129 = vmin.f32 %v128, 1.0
    %v130 = vmax.f32 %v129, -1.0
    %v131 = vmul.f32 %v90, %v90
    %v132 = vmin.f32 16.0, %v131
    %v133 = vmul.f32 %v132, 2.1237322e-06
    %v134 = vadd.f32 %v133, 0.00028619796
    %v135 = vmul.f32 %v132, %v134
    %v136 = vadd.f32 %v135, 0.0036580483
    %v137 = vmul.f32 %v132, %v136
    %v138 = vadd.f32 %v137, 0.05243302
    %v139 = vmul.f32 %v132, %v138
    %v140 = vadd.f32 %v139, 0.18741608
    %v141 = vmul.f32 %v132, %v140
    %v142 = vadd.f32 %v141, 1.1283791
    %v143 = vmul.f32 %v90, %v142
    %v144 = vmul.f32 %v132, 3.8918573e-05
    %v145 = vadd.f32 %v144, 0.001143296
    %v146 = vmul.f32 %v132, %v145
    %v147 = vadd.f32 %v146, 0.014752088
    %v148 = vmul.f32 %v132, %v147
    %v149 = vadd.f32 %v148, 0.112945676
    %v150 = vmul.f32 %v132, %v149
    %v151 = vadd.f32 %v150, 0.4994258
    %v152 = vmul.f32 %v132, %v151
    %v153 = vadd.f32 %v152, 1.0
    %v154 = vrcp.pop %v153
    %v155 = vmul.f32 %v153, %v154
    %v156 = vsub.f32 1.0, %v155
    %v157 = vmul.f32 %v154, %v156
    %v158 = vadd.f32 %v154, %v157
    %vm159 = vweird.f32 %v153
    %vm160 = vweird.f32 %v154
    %vm161 = vmor %vm159, %vm160
    %v162 = vsel %vm161, %v154, %v158
    %v163 = vand.u32 2147483647, %v153
    %vm164 = vcmp.eq.f32.partialorder %v163, 8.507059e+37
    %v165 = vand.u32 %v153, 2147483648
    %v166 = vor.u32 1.1754944e-38, %v165
    %v167 = vsel %vm164, %v166, %v162
    %v168 = vmul.f32 %v143, %v167
    %v169 = vmin.f32 %v168, 1.0
    %v170 = vmax.f32 %v169, -1.0
    %v171 = vadd.f32 %v130, 1.0
    %v172 = vadd.f32 %v170, 1.0
    %v173 = vmul.f32 %v87, %v171
    %v174 = vmul.f32 %v88, %v172
    %175 = vst [vmem:[#allocation7] sm:$0xff] %v173
    %176 = vst [vmem:[#allocation7 + $0x8] sm:$0xff] %v174
    // Predicated region
    $region22: #{bert_intermediate.1} parent=1 // pred_check
      _
    $region23: #{bert_intermediate.1} parent=1 // pred_check_branch
      %178 = sbr.rel (0) target = $region25
    $region24: #{bert_intermediate.1} parent=1 // pred_region
      %180 = vsyncadd [#allocation4], 0
      %s181 = sshll.u32 [#allocation7], 4
      %s182 = int_to_ptr.vmem [resolvable:$true] %s181
      %s183 = sshll.u32 %s3, 4
      %s184 = int_to_ptr.hbm [resolvable:$true] %s183
      %189 = dma.vmem_to_hbm [thread:$0]  %s182, 256, %s184, [#allocation4], 128, 128, 8
    $region25: #{bert_intermediate.1} parent=1 // pred_fallthru
      _
    // Predicated region
    $region26: #{bert_intermediate.1} parent=1 // pred_check
      _
    $region27: #{bert_intermediate.1} parent=1 // pred_check_branch
      %191 = sbr.rel (0) target = $region29
    $region28: #{bert_intermediate.1} parent=1 // pred_region
      %193 = dma.done [#allocation4], 256
    $region29: #{bert_intermediate.1} parent=1 // pred_fallthru
      _
    %194 = vsyncpa [#allocation3], 1
    %195 = vsyncpa [#allocation6], 1
    %196 = vsyncpa [#allocation4], 1

</llo_original>
